<compile_context>
chip_gen: v5e
topology: v5e:2x2
jax: 0.10.0
libtpu: 0.0.40
codegen_flags: <defaults>
</compile_context>

<pallas_src>
import functools

import jax
import jax.numpy as jnp
from jax.experimental import pallas as pl
from jax.experimental.pallas import tpu as pltpu

_HIDDEN = 13
_LANES = 128


def _mlp_kernel(x_ref, w1_ref, b1_ref, w2_ref, b2_ref, o_ref, *, apply_tanh):
    # x_ref / o_ref : (block_rows, 128) f32, batch flattened over sublane+lane.
    # w1_ref, b1_ref, w2_ref : (13,) f32 in SMEM.   b2_ref : (1,) f32 in SMEM.
    x = x_ref[...]

    if apply_tanh:
        # y = sum_j w2[j] * tanh(w1[j]*x + b1[j]) + b2   (VPU FMAs + EUP tanh)
        acc = jnp.full_like(x, b2_ref[0])
        for j in range(_HIDDEN):                       # static unroll
            h = jnp.tanh(x * w1_ref[j] + b1_ref[j])
            acc = acc + h * w2_ref[j]
        o_ref[...] = acc
    else:
        # No nonlinearity: the two linear layers collapse to one affine map.
        # A = sum_j w1[j]*w2[j],  C = sum_j b1[j]*w2[j] + b2  (scalar unit).
        a = 0.0
        c = b2_ref[0]
        for j in range(_HIDDEN):                       # static unroll, scalar ALU
            a = a + w1_ref[j] * w2_ref[j]
            c = c + b1_ref[j] * w2_ref[j]
        o_ref[...] = x * a + c                          # 2 VPU ops / element


def subclass_model_forward(x, w1, b1, w2, b2, *, apply_tanh, block_rows=None):
    """x: (B, 1) f32.  w1/b1/w2: (13, 1) f32.  b2: (1, 1) f32.  Returns (B, 1) f32."""
    B = x.shape[0]
    rows_needed = -(-B // _LANES)                       # ceil(B / 128)
    if block_rows is None:
        # One block if the batch is small, otherwise 512-row (256 KiB) blocks.
        block_rows = min(512, -(-rows_needed // 8) * 8)
    block = block_rows * _LANES
    nb = -(-B // block)                                 # grid size
    Bp = nb * block

    # Pack the batch densely over sublanes + lanes: (Bp//128, 128).
    x_flat = x.reshape(-1).astype(jnp.float32)
    if Bp != B:
        x_flat = jnp.pad(x_flat, (0, Bp - B))
    x2d = x_flat.reshape(Bp // _LANES, _LANES)

    kernel = functools.partial(_mlp_kernel, apply_tanh=apply_tanh)

    flops = (4 * _HIDDEN if apply_tanh else 2) * Bp
    transcendentals = _HIDDEN * Bp if apply_tanh else 0
    bytes_accessed = 8 * Bp + 4 * (3 * _HIDDEN + 1)     # x in + y out + tiny weights

    smem = pltpu.MemorySpace.SMEM
    out = pl.pallas_call(
        kernel,
        out_shape=jax.ShapeDtypeStruct((Bp // _LANES, _LANES), jnp.float32),
        grid=(nb,),
        in_specs=[
            pl.BlockSpec((block_rows, _LANES), lambda i: (i, 0)),  # x block, pipelined
            pl.BlockSpec(memory_space=smem),                       # w1 (13,)
            pl.BlockSpec(memory_space=smem),                       # b1 (13,)
            pl.BlockSpec(memory_space=smem),                       # w2 (13,)
            pl.BlockSpec(memory_space=smem),                       # b2 (1,)
        ],
        out_specs=pl.BlockSpec((block_rows, _LANES), lambda i: (i, 0)),
        compiler_params=pltpu.CompilerParams(
            dimension_semantics=("parallel",),
        ),
        cost_estimate=pl.CostEstimate(
            flops=flops,
            transcendentals=transcendentals,
            bytes_accessed=bytes_accessed,
        ),
    )(x2d,
      w1.reshape(_HIDDEN).astype(jnp.float32),
      b1.reshape(_HIDDEN).astype(jnp.float32),
      w2.reshape(_HIDDEN).astype(jnp.float32),
      b2.reshape(1).astype(jnp.float32))

    return out.reshape(Bp, 1)[:B]


def _reference(x, w1, b1, w2, b2, apply_tanh):
    h = x * w1.reshape(1, _HIDDEN) + b1.reshape(1, _HIDDEN)
    if apply_tanh:
        h = jnp.tanh(h)
    return h @ w2.reshape(_HIDDEN, 1) + b2.reshape(1, 1)


if __name__ == "__main__":
    key = jax.random.PRNGKey(0)
    k_x, k_w1, k_b1, k_w2, k_b2 = jax.random.split(key, 5)

    # Small batch; block_rows=8 -> 1024-element blocks -> a 2-step grid with padding.
    B = 1500
    x = jax.random.normal(k_x, (B, 1), dtype=jnp.float32)

    # PyTorch-style init: uniform(+-1/sqrt(fan_in)).
    w1 = jax.random.uniform(k_w1, (_HIDDEN, 1), jnp.float32, -1.0, 1.0)        # fan_in=1
    b1 = jax.random.uniform(k_b1, (_HIDDEN, 1), jnp.float32, -1.0, 1.0)
    bound2 = 1.0 / float(jnp.sqrt(13.0))
    w2 = jax.random.uniform(k_w2, (_HIDDEN, 1), jnp.float32, -bound2, bound2)  # fan_in=13
    b2 = jax.random.uniform(k_b2, (1, 1), jnp.float32, -bound2, bound2)

    # TODO(synk): the torch.rand() > 0.5 runtime branch (and its print side effect)
    # has no in-kernel equivalent; it is resolved at trace time, one compiled
    # variant per coin outcome.  Both variants are exercised and checked here.
    for apply_tanh in (True, False):
        y = subclass_model_forward(x, w1, b1, w2, b2,
                                   apply_tanh=apply_tanh, block_rows=8)
        jax.block_until_ready(y)
        y_ref = _reference(x, w1, b1, w2, b2, apply_tanh)
        assert y.shape == (B, 1)
        assert jnp.allclose(y, y_ref, atol=1e-5, rtol=1e-5), (
            f"mismatch vs reference (apply_tanh={apply_tanh})")

    print("KERNEL_OK")
</pallas_src>

<mosaic_0001>
module attributes {stable_mosaic.version = 11 : i64} {
  func.func @_mlp_kernel(%arg0: i32, %arg1: memref<8x128xf32, #tpu.memory_space<vmem>>, %arg2: memref<13xf32, #tpu.memory_space<smem>>, %arg3: memref<13xf32, #tpu.memory_space<smem>>, %arg4: memref<13xf32, #tpu.memory_space<smem>>, %arg5: memref<1xf32, #tpu.memory_space<smem>>, %arg6: memref<8x128xf32, #tpu.memory_space<vmem>>) attributes {dimension_semantics = [#tpu.dimension_semantics<parallel>], iteration_bounds = array<i64: 2>, scalar_prefetch = 0 : i64, scratch_operands = 0 : i64, tpu.core_type = #tpu.core_type<tc>, window_params = [{transform_indices = @transform_0, window_bounds = array<i64: 8, 128>}, {transform_indices = @transform_1, window_bounds = array<i64: 13>}, {transform_indices = @transform_2, window_bounds = array<i64: 13>}, {transform_indices = @transform_3, window_bounds = array<i64: 13>}, {transform_indices = @transform_4, window_bounds = array<i64: 1>}, {transform_indices = @transform_5, window_bounds = array<i64: 8, 128>}]} {
    %c0 = arith.constant 0 : index
    %c0_0 = arith.constant 0 : index
    %0 = vector.load %arg1[%c0, %c0_0] : memref<8x128xf32, #tpu.memory_space<vmem>>, vector<8x128xf32>
    %c0_1 = arith.constant 0 : index
    %1 = memref.load %arg5[%c0_1] : memref<1xf32, #tpu.memory_space<smem>>
    %2 = vector.broadcast %1 : f32 to vector<8x128xf32>
    %c0_2 = arith.constant 0 : index
    %3 = memref.load %arg2[%c0_2] : memref<13xf32, #tpu.memory_space<smem>>
    %4 = vector.broadcast %3 : f32 to vector<8x128xf32>
    %5 = arith.mulf %0, %4 : vector<8x128xf32>
    %c0_3 = arith.constant 0 : index
    %6 = memref.load %arg3[%c0_3] : memref<13xf32, #tpu.memory_space<smem>>
    %7 = vector.broadcast %6 : f32 to vector<8x128xf32>
    %8 = arith.addf %5, %7 : vector<8x128xf32>
    %9 = math.tanh %8 : vector<8x128xf32>
    %c0_4 = arith.constant 0 : index
    %10 = memref.load %arg4[%c0_4] : memref<13xf32, #tpu.memory_space<smem>>
    %11 = vector.broadcast %10 : f32 to vector<8x128xf32>
    %12 = arith.mulf %9, %11 : vector<8x128xf32>
    %13 = arith.addf %2, %12 : vector<8x128xf32>
    %c1 = arith.constant 1 : index
    %14 = memref.load %arg2[%c1] : memref<13xf32, #tpu.memory_space<smem>>
    %15 = vector.broadcast %14 : f32 to vector<8x128xf32>
    %16 = arith.mulf %0, %15 : vector<8x128xf32>
    %c1_5 = arith.constant 1 : index
    %17 = memref.load %arg3[%c1_5] : memref<13xf32, #tpu.memory_space<smem>>
    %18 = vector.broadcast %17 : f32 to vector<8x128xf32>
    %19 = arith.addf %16, %18 : vector<8x128xf32>
    %20 = math.tanh %19 : vector<8x128xf32>
    %c1_6 = arith.constant 1 : index
    %21 = memref.load %arg4[%c1_6] : memref<13xf32, #tpu.memory_space<smem>>
    %22 = vector.broadcast %21 : f32 to vector<8x128xf32>
    %23 = arith.mulf %20, %22 : vector<8x128xf32>
    %24 = arith.addf %13, %23 : vector<8x128xf32>
    %c2 = arith.constant 2 : index
    %25 = memref.load %arg2[%c2] : memref<13xf32, #tpu.memory_space<smem>>
    %26 = vector.broadcast %25 : f32 to vector<8x128xf32>
    %27 = arith.mulf %0, %26 : vector<8x128xf32>
    %c2_7 = arith.constant 2 : index
    %28 = memref.load %arg3[%c2_7] : memref<13xf32, #tpu.memory_space<smem>>
    %29 = vector.broadcast %28 : f32 to vector<8x128xf32>
    %30 = arith.addf %27, %29 : vector<8x128xf32>
    %31 = math.tanh %30 : vector<8x128xf32>
    %c2_8 = arith.constant 2 : index
    %32 = memref.load %arg4[%c2_8] : memref<13xf32, #tpu.memory_space<smem>>
    %33 = vector.broadcast %32 : f32 to vector<8x128xf32>
    %34 = arith.mulf %31, %33 : vector<8x128xf32>
    %35 = arith.addf %24, %34 : vector<8x128xf32>
    %c3 = arith.constant 3 : index
    %36 = memref.load %arg2[%c3] : memref<13xf32, #tpu.memory_space<smem>>
    %37 = vector.broadcast %36 : f32 to vector<8x128xf32>
    %38 = arith.mulf %0, %37 : vector<8x128xf32>
    %c3_9 = arith.constant 3 : index
    %39 = memref.load %arg3[%c3_9] : memref<13xf32, #tpu.memory_space<smem>>
    %40 = vector.broadcast %39 : f32 to vector<8x128xf32>
    %41 = arith.addf %38, %40 : vector<8x128xf32>
    %42 = math.tanh %41 : vector<8x128xf32>
    %c3_10 = arith.constant 3 : index
    %43 = memref.load %arg4[%c3_10] : memref<13xf32, #tpu.memory_space<smem>>
    %44 = vector.broadcast %43 : f32 to vector<8x128xf32>
    %45 = arith.mulf %42, %44 : vector<8x128xf32>
    %46 = arith.addf %35, %45 : vector<8x128xf32>
    %c4 = arith.constant 4 : index
    %47 = memref.load %arg2[%c4] : memref<13xf32, #tpu.memory_space<smem>>
    %48 = vector.broadcast %47 : f32 to vector<8x128xf32>
    %49 = arith.mulf %0, %48 : vector<8x128xf32>
    %c4_11 = arith.constant 4 : index
    %50 = memref.load %arg3[%c4_11] : memref<13xf32, #tpu.memory_space<smem>>
    %51 = vector.broadcast %50 : f32 to vector<8x128xf32>
    %52 = arith.addf %49, %51 : vector<8x128xf32>
    %53 = math.tanh %52 : vector<8x128xf32>
    %c4_12 = arith.constant 4 : index
    %54 = memref.load %arg4[%c4_12] : memref<13xf32, #tpu.memory_space<smem>>
    %55 = vector.broadcast %54 : f32 to vector<8x128xf32>
    %56 = arith.mulf %53, %55 : vector<8x128xf32>
    %57 = arith.addf %46, %56 : vector<8x128xf32>
    %c5 = arith.constant 5 : index
    %58 = memref.load %arg2[%c5] : memref<13xf32, #tpu.memory_space<smem>>
    %59 = vector.broadcast %58 : f32 to vector<8x128xf32>
    %60 = arith.mulf %0, %59 : vector<8x128xf32>
    %c5_13 = arith.constant 5 : index
    %61 = memref.load %arg3[%c5_13] : memref<13xf32, #tpu.memory_space<smem>>
    %62 = vector.broadcast %61 : f32 to vector<8x128xf32>
    %63 = arith.addf %60, %62 : vector<8x128xf32>
    %64 = math.tanh %63 : vector<8x128xf32>
    %c5_14 = arith.constant 5 : index
    %65 = memref.load %arg4[%c5_14] : memref<13xf32, #tpu.memory_space<smem>>
    %66 = vector.broadcast %65 : f32 to vector<8x128xf32>
    %67 = arith.mulf %64, %66 : vector<8x128xf32>
    %68 = arith.addf %57, %67 : vector<8x128xf32>
    %c6 = arith.constant 6 : index
    %69 = memref.load %arg2[%c6] : memref<13xf32, #tpu.memory_space<smem>>
    %70 = vector.broadcast %69 : f32 to vector<8x128xf32>
    %71 = arith.mulf %0, %70 : vector<8x128xf32>
    %c6_15 = arith.constant 6 : index
    %72 = memref.load %arg3[%c6_15] : memref<13xf32, #tpu.memory_space<smem>>
    %73 = vector.broadcast %72 : f32 to vector<8x128xf32>
    %74 = arith.addf %71, %73 : vector<8x128xf32>
    %75 = math.tanh %74 : vector<8x128xf32>
    %c6_16 = arith.constant 6 : index
    %76 = memref.load %arg4[%c6_16] : memref<13xf32, #tpu.memory_space<smem>>
    %77 = vector.broadcast %76 : f32 to vector<8x128xf32>
    %78 = arith.mulf %75, %77 : vector<8x128xf32>
    %79 = arith.addf %68, %78 : vector<8x128xf32>
    %c7 = arith.constant 7 : index
    %80 = memref.load %arg2[%c7] : memref<13xf32, #tpu.memory_space<smem>>
    %81 = vector.broadcast %80 : f32 to vector<8x128xf32>
    %82 = arith.mulf %0, %81 : vector<8x128xf32>
    %c7_17 = arith.constant 7 : index
    %83 = memref.load %arg3[%c7_17] : memref<13xf32, #tpu.memory_space<smem>>
    %84 = vector.broadcast %83 : f32 to vector<8x128xf32>
    %85 = arith.addf %82, %84 : vector<8x128xf32>
    %86 = math.tanh %85 : vector<8x128xf32>
    %c7_18 = arith.constant 7 : index
    %87 = memref.load %arg4[%c7_18] : memref<13xf32, #tpu.memory_space<smem>>
    %88 = vector.broadcast %87 : f32 to vector<8x128xf32>
    %89 = arith.mulf %86, %88 : vector<8x128xf32>
    %90 = arith.addf %79, %89 : vector<8x128xf32>
    %c8 = arith.constant 8 : index
    %91 = memref.load %arg2[%c8] : memref<13xf32, #tpu.memory_space<smem>>
    %92 = vector.broadcast %91 : f32 to vector<8x128xf32>
    %93 = arith.mulf %0, %92 : vector<8x128xf32>
    %c8_19 = arith.constant 8 : index
    %94 = memref.load %arg3[%c8_19] : memref<13xf32, #tpu.memory_space<smem>>
    %95 = vector.broadcast %94 : f32 to vector<8x128xf32>
    %96 = arith.addf %93, %95 : vector<8x128xf32>
    %97 = math.tanh %96 : vector<8x128xf32>
    %c8_20 = arith.constant 8 : index
    %98 = memref.load %arg4[%c8_20] : memref<13xf32, #tpu.memory_space<smem>>
    %99 = vector.broadcast %98 : f32 to vector<8x128xf32>
    %100 = arith.mulf %97, %99 : vector<8x128xf32>
    %101 = arith.addf %90, %100 : vector<8x128xf32>
    %c9 = arith.constant 9 : index
    %102 = memref.load %arg2[%c9] : memref<13xf32, #tpu.memory_space<smem>>
    %103 = vector.broadcast %102 : f32 to vector<8x128xf32>
    %104 = arith.mulf %0, %103 : vector<8x128xf32>
    %c9_21 = arith.constant 9 : index
    %105 = memref.load %arg3[%c9_21] : memref<13xf32, #tpu.memory_space<smem>>
    %106 = vector.broadcast %105 : f32 to vector<8x128xf32>
    %107 = arith.addf %104, %106 : vector<8x128xf32>
    %108 = math.tanh %107 : vector<8x128xf32>
    %c9_22 = arith.constant 9 : index
    %109 = memref.load %arg4[%c9_22] : memref<13xf32, #tpu.memory_space<smem>>
    %110 = vector.broadcast %109 : f32 to vector<8x128xf32>
    %111 = arith.mulf %108, %110 : vector<8x128xf32>
    %112 = arith.addf %101, %111 : vector<8x128xf32>
    %c10 = arith.constant 10 : index
    %113 = memref.load %arg2[%c10] : memref<13xf32, #tpu.memory_space<smem>>
    %114 = vector.broadcast %113 : f32 to vector<8x128xf32>
    %115 = arith.mulf %0, %114 : vector<8x128xf32>
    %c10_23 = arith.constant 10 : index
    %116 = memref.load %arg3[%c10_23] : memref<13xf32, #tpu.memory_space<smem>>
    %117 = vector.broadcast %116 : f32 to vector<8x128xf32>
    %118 = arith.addf %115, %117 : vector<8x128xf32>
    %119 = math.tanh %118 : vector<8x128xf32>
    %c10_24 = arith.constant 10 : index
    %120 = memref.load %arg4[%c10_24] : memref<13xf32, #tpu.memory_space<smem>>
    %121 = vector.broadcast %120 : f32 to vector<8x128xf32>
    %122 = arith.mulf %119, %121 : vector<8x128xf32>
    %123 = arith.addf %112, %122 : vector<8x128xf32>
    %c11 = arith.constant 11 : index
    %124 = memref.load %arg2[%c11] : memref<13xf32, #tpu.memory_space<smem>>
    %125 = vector.broadcast %124 : f32 to vector<8x128xf32>
    %126 = arith.mulf %0, %125 : vector<8x128xf32>
    %c11_25 = arith.constant 11 : index
    %127 = memref.load %arg3[%c11_25] : memref<13xf32, #tpu.memory_space<smem>>
    %128 = vector.broadcast %127 : f32 to vector<8x128xf32>
    %129 = arith.addf %126, %128 : vector<8x128xf32>
    %130 = math.tanh %129 : vector<8x128xf32>
    %c11_26 = arith.constant 11 : index
    %131 = memref.load %arg4[%c11_26] : memref<13xf32, #tpu.memory_space<smem>>
    %132 = vector.broadcast %131 : f32 to vector<8x128xf32>
    %133 = arith.mulf %130, %132 : vector<8x128xf32>
    %134 = arith.addf %123, %133 : vector<8x128xf32>
    %c12 = arith.constant 12 : index
    %135 = memref.load %arg2[%c12] : memref<13xf32, #tpu.memory_space<smem>>
    %136 = vector.broadcast %135 : f32 to vector<8x128xf32>
    %137 = arith.mulf %0, %136 : vector<8x128xf32>
    %c12_27 = arith.constant 12 : index
    %138 = memref.load %arg3[%c12_27] : memref<13xf32, #tpu.memory_space<smem>>
    %139 = vector.broadcast %138 : f32 to vector<8x128xf32>
    %140 = arith.addf %137, %139 : vector<8x128xf32>
    %141 = math.tanh %140 : vector<8x128xf32>
    %c12_28 = arith.constant 12 : index
    %142 = memref.load %arg4[%c12_28] : memref<13xf32, #tpu.memory_space<smem>>
    %143 = vector.broadcast %142 : f32 to vector<8x128xf32>
    %144 = arith.mulf %141, %143 : vector<8x128xf32>
    %145 = arith.addf %134, %144 : vector<8x128xf32>
    %c0_29 = arith.constant 0 : index
    %c0_30 = arith.constant 0 : index
    %146 = vector.load %arg6[%c0_29, %c0_30] : memref<8x128xf32, #tpu.memory_space<vmem>>, vector<8x128xf32>
    tpu.vector_store %arg6[%c0_29, %c0_30], %145 {strides = array<i32>} : memref<8x128xf32, #tpu.memory_space<vmem>>, vector<8x128xf32>,
    return
  }
  func.func @transform_0(%arg0: i32) -> (i32, i32) {
    %c0_i32 = arith.constant 0 : i32
    %c0_i32_0 = arith.constant 0 : i32
    return %arg0, %c0_i32 : i32, i32
  }
  func.func @transform_1(%arg0: i32) -> i32 {
    %c0_i32 = arith.constant 0 : i32
    %c0_i32_0 = arith.constant 0 : i32
    return %c0_i32 : i32
  }
  func.func @transform_2(%arg0: i32) -> i32 {
    %c0_i32 = arith.constant 0 : i32
    %c0_i32_0 = arith.constant 0 : i32
    return %c0_i32 : i32
  }
  func.func @transform_3(%arg0: i32) -> i32 {
    %c0_i32 = arith.constant 0 : i32
    %c0_i32_0 = arith.constant 0 : i32
    return %c0_i32 : i32
  }
  func.func @transform_4(%arg0: i32) -> i32 {
    %c0_i32 = arith.constant 0 : i32
    %c0_i32_0 = arith.constant 0 : i32
    return %c0_i32 : i32
  }
  func.func @transform_5(%arg0: i32) -> (i32, i32) {
    %c0_i32 = arith.constant 0 : i32
    %c0_i32_0 = arith.constant 0 : i32
    return %arg0, %c0_i32 : i32, i32
  }
}

</mosaic_0001>

<llo_original>
// kernel: tpu_custom_call.1
$region0: #{tpu_custom_call.1}
  #allocation0 [shape = 'u32[]', space=smem, size = 0x4, offset = 0x4, fixed_abs, tag = 'smem constant byte address 0x4 - core index']
  #allocation1 [shape = 'u32[72,128]{1,0:T(1,128)}', space=vmem, size = 0x9000, scoped, tag = 'internal scratch']
  #allocation2 [shape = 'f32[1]{0:T(128)S(6)}', space=smem, size = 0x200, scoped, tag = 'scoped memory for tpu_custom_call.1']
  %s0 = inlined_call_operand.hbm [shape: f32[16,128], index: 0, kind: input, shape index: {}]
  %s1 = inlined_call_operand.vmem [shape: f32[13], index: 1, kind: input, shape index: {}]
  %s2 = inlined_call_operand.vmem [shape: f32[13], index: 2, kind: input, shape index: {}]
  %s3 = inlined_call_operand.vmem [shape: f32[13], index: 3, kind: input, shape index: {}]
  %s4 = inlined_call_operand.<no memory space> [shape: f32[1], index: 4, kind: input, shape index: {}]
  %s5 = inlined_call_operand.hbm [shape: f32[16,128], index: 5, kind: output, shape index: {}]
  %s6 = sld [smem:[#allocation0]]
  $region69: #{tpu_custom_call.1} parent=0
    _
  %s8 = ssub.s32 1, %s6
  %s9 = scalar_select 0, %s8, %s6
  %10 = sst [smem:[#allocation2]] %s4
  $region1: #{tpu_custom_call.1} parent=0
    #allocation3 [shape = 'u8[8192]{0}', space=vmem, size = 0x2000, scoped, tag = 'input window, operand 0']
    #allocation4 [shape = 's32[2]{0}', space=sflag, size = 0x8, scoped, tag = 'scoped memory for tpu_custom_call.1']
    #allocation5 [shape = 's32[2]{0}', space=sflag, size = 0x8, scoped, tag = 'scoped memory for tpu_custom_call.1']
    #allocation6 [shape = 's32[2]{0}', space=sflag, size = 0x8, scoped, tag = 'scoped memory for tpu_custom_call.1']
    #allocation7 [shape = 'u8[512]{0}', space=smem, size = 0x200, scoped, tag = 'input window, operand 1, single buffered']
    #allocation8 [shape = 'u8[512]{0}', space=smem, size = 0x200, scoped, tag = 'input window, operand 2, single buffered']
    #allocation9 [shape = 's32[1]{0}', space=sflag, size = 0x4, scoped, tag = 'scoped memory for tpu_custom_call.1']
    #allocation10 [shape = 'u8[512]{0}', space=smem, size = 0x200, scoped, tag = 'input window, operand 3, single buffered']
    #allocation11 [shape = 'u8[8192]{0}', space=vmem, size = 0x2000, scoped, tag = 'output window, operand 0']
    %11 = vsyncpa [#allocation4], 0
    %s12 = scalar_lea.sflag [#allocation4], 1
    %13 = vsyncpa %s12, 0
    %14 = vsyncpa [#allocation6], 0
    %15 = vsyncpa [#allocation9], 0
    %16 = vsyncpa [#allocation5], 0
    %s17 = scalar_lea.sflag [#allocation5], 1
    %18 = vsyncpa %s17, 0
    loop: start=0, step=1, limit=4
    $region2: #{tpu_custom_call.1} parent=1 // loop_pre_header
      _
    $region3: #{tpu_custom_call.1} parent=1 // loop_header
      %s20 = sphi 0, %s24
      %p21 = scmp.ge.s32.totalorder %s20, 4
      %s30 = sphi 0, %s32
      %s33 = sphi 0, %s30
      %s34 = sphi 0, %s33
      %s50 = sphi 0, %s34
      %s54 = sphi 0, %s54
      %s56 = sphi 0, %s54
      %s57 = sphi 0, %s56
      %s71 = sphi 0, %s57
      %s75 = sphi 0, %s75
      %s77 = sphi 0, %s75
      %s78 = sphi 0, %s77
      %s92 = sphi 0, %s78
      %s96 = sphi 0, %s96
      %s98 = sphi 0, %s96
      %s99 = sphi 0, %s98
      %s113 = sphi 0, %s99
      %s117 = sphi 0, %s117
      %s119 = sphi 0, %s117
      %s120 = sphi 0, %s119
      %s134 = sphi 0, %s120
      %s140 = sphi 0, %s142
      %s143 = sphi 0, %s140
      %s144 = sphi 0, %s143
      %s160 = sphi 0, %s144
    $region4: #{tpu_custom_call.1} parent=1 // loop_header_branch
      %23 = sbr.rel (%p21) target = $region8
    $region5: #{tpu_custom_call.1} parent=1 // loop_body
      %s25 = ssub.s32 %s20, 1
      %s26 = ssub.s32 %s20, 2
      %s27 = sadd.s32 %s20, 1
      %s28 = ssub.s32 %s20, %s27
      %p29 = scmp.eq.s32.totalorder %s28, 0
      %s31 = sadd.s32 %s30, 1
      %s32 = scalar_select %p29, %s30, %s31
      %p35 = pneg %p29
      %p36 = scmp.eq.s32.totalorder %s20, 1
      %p37 = por %p35, %p36
      %p38 = scmp.ne.s32.totalorder %s30, %s33
      %p39 = scmp.eq.s32.totalorder %s20, 0
      %p40 = por %p38, %p39
      %p41 = scmp.ne.s32.totalorder %s30, %s33
      %p42 = scmp.eq.s32.totalorder %s25, 1
      %p43 = por %p41, %p42
      %p44 = scmp.ne.s32.totalorder %s33, %s34
      %p45 = scmp.eq.s32.totalorder %s25, 0
      %p46 = por %p44, %p45
      %p47 = scmp.ne.s32.totalorder %s33, %s34
      %p48 = scmp.eq.s32.totalorder %s26, 1
      %p49 = por %p47, %p48
      %p51 = scmp.ne.s32.totalorder %s34, %s50
      %p52 = scmp.eq.s32.totalorder %s26, 0
      %p53 = por %p51, %p52
      %s55 = sadd.s32 %s54, 1
      %p58 = scmp.eq.s32.totalorder %s20, 1
      %p59 = scmp.ne.s32.totalorder %s54, %s56
      %p60 = scmp.eq.s32.totalorder %s20, 0
      %p61 = por %p59, %p60
      %p62 = scmp.ne.s32.totalorder %s54, %s56
      %p63 = scmp.eq.s32.totalorder %s25, 1
      %p64 = por %p62, %p63
      %p65 = scmp.ne.s32.totalorder %s56, %s57
      %p66 = scmp.eq.s32.totalorder %s25, 0
      %p67 = por %p65, %p66
      %p68 = scmp.ne.s32.totalorder %s56, %s57
      %p69 = scmp.eq.s32.totalorder %s26, 1
      %p70 = por %p68, %p69
      %p72 = scmp.ne.s32.totalorder %s57, %s71
      %p73 = scmp.eq.s32.totalorder %s26, 0
      %p74 = por %p72, %p73
      %s76 = sadd.s32 %s75, 1
      %p79 = scmp.eq.s32.totalorder %s20, 1
      %p80 = scmp.ne.s32.totalorder %s75, %s77
      %p81 = scmp.eq.s32.totalorder %s20, 0
      %p82 = por %p80, %p81
      %p83 = scmp.ne.s32.totalorder %s75, %s77
      %p84 = scmp.eq.s32.totalorder %s25, 1
      %p85 = por %p83, %p84
      %p86 = scmp.ne.s32.totalorder %s77, %s78
      %p87 = scmp.eq.s32.totalorder %s25, 0
      %p88 = por %p86, %p87
      %p89 = scmp.ne.s32.totalorder %s77, %s78
      %p90 = scmp.eq.s32.totalorder %s26, 1
      %p91 = por %p89, %p90
      %p93 = scmp.ne.s32.totalorder %s78, %s92
      %p94 = scmp.eq.s32.totalorder %s26, 0
      %p95 = por %p93, %p94
      %s97 = sadd.s32 %s96, 1
      %p100 = scmp.eq.s32.totalorder %s20, 1
      %p101 = scmp.ne.s32.totalorder %s96, %s98
      %p102 = scmp.eq.s32.totalorder %s20, 0
      %p103 = por %p101, %p102
      %p104 = scmp.ne.s32.totalorder %s96, %s98
      %p105 = scmp.eq.s32.totalorder %s25, 1
      %p106 = por %p104, %p105
      %p107 = scmp.ne.s32.totalorder %s98, %s99
      %p108 = scmp.eq.s32.totalorder %s25, 0
      %p109 = por %p107, %p108
      %p110 = scmp.ne.s32.totalorder %s98, %s99
      %p111 = scmp.eq.s32.totalorder %s26, 1
      %p112 = por %p110, %p111
      %p114 = scmp.ne.s32.totalorder %s99, %s113
      %p115 = scmp.eq.s32.totalorder %s26, 0
      %p116 = por %p114, %p115
      %s118 = sadd.s32 %s117, 1
      %p121 = scmp.eq.s32.totalorder %s20, 1
      %p122 = scmp.ne.s32.totalorder %s117, %s119
      %p123 = scmp.eq.s32.totalorder %s20, 0
      %p124 = por %p122, %p123
      %p125 = scmp.ne.s32.totalorder %s117, %s119
      %p126 = scmp.eq.s32.totalorder %s25, 1
      %p127 = por %p125, %p126
      %p128 = scmp.ne.s32.totalorder %s119, %s120
      %p129 = scmp.eq.s32.totalorder %s25, 0
      %p130 = por %p128, %p129
      %p131 = scmp.ne.s32.totalorder %s119, %s120
      %p132 = scmp.eq.s32.totalorder %s26, 1
      %p133 = por %p131, %p132
      %p135 = scmp.ne.s32.totalorder %s120, %s134
      %p136 = scmp.eq.s32.totalorder %s26, 0
      %p137 = por %p135, %p136
      %s138 = ssub.s32 %s20, %s27
      %p139 = scmp.eq.s32.totalorder %s138, 0
      %s141 = sadd.s32 %s140, 1
      %s142 = scalar_select %p139, %s140, %s141
      %p145 = pneg %p139
      %p146 = scmp.eq.s32.totalorder %s20, 1
      %p147 = por %p145, %p146
      %p148 = scmp.ne.s32.totalorder %s140, %s143
      %p149 = scmp.eq.s32.totalorder %s20, 0
      %p150 = por %p148, %p149
      %p151 = scmp.ne.s32.totalorder %s140, %s143
      %p152 = scmp.eq.s32.totalorder %s25, 1
      %p153 = por %p151, %p152
      %p154 = scmp.ne.s32.totalorder %s143, %s144
      %p155 = scmp.eq.s32.totalorder %s25, 0
      %p156 = por %p154, %p155
      %p157 = scmp.ne.s32.totalorder %s143, %s144
      %p158 = scmp.eq.s32.totalorder %s26, 1
      %p159 = por %p157, %p158
      %p161 = scmp.ne.s32.totalorder %s144, %s160
      %p162 = scmp.eq.s32.totalorder %s26, 0
      %p163 = por %p161, %p162
      %p164 = scmp.le.s32.totalorder 1, %s20
      %p165 = scmp.lt.s32.totalorder %s20, 3
      %p166 = pnand %p164, %p165
      %p167 = pneg %p166
      // Predicated region
      $region9: #{tpu_custom_call.1} parent=5 // pred_check
        _
      $region10: #{tpu_custom_call.1} parent=5 // pred_check_branch
        %169 = sbr.rel (%p166) target = $region12
      $region11: #{tpu_custom_call.1} parent=5 // pred_region
        %s170 = ssub.s32 %s20, 1
        // Predicated region
        $region13: #{tpu_custom_call.1} parent=11 // pred_check
          %p171 = pneg %p67
        $region14: #{tpu_custom_call.1} parent=11 // pred_check_branch
          %173 = sbr.rel (%p171) target = $region16
        $region15: #{tpu_custom_call.1} parent=11 // pred_region
          %175 = vsyncadd [#allocation6], 0
          %s177 = sshll.u32 %s1, 4
          %s178 = int_to_ptr.vmem [resolvable:$true] %s177
          %180 = dma.vmem_to_smem %s178, 16, [#allocation7], [#allocation6]
        $region16: #{tpu_custom_call.1} parent=11 // pred_fallthru
          _
        // Predicated region
        $region17: #{tpu_custom_call.1} parent=11 // pred_check
          %p181 = pneg %p88
        $region18: #{tpu_custom_call.1} parent=11 // pred_check_branch
          %183 = sbr.rel (%p181) target = $region20
        $region19: #{tpu_custom_call.1} parent=11 // pred_region
          %185 = vsyncadd [#allocation9], 0
          %s187 = sshll.u32 %s2, 4
          %s188 = int_to_ptr.vmem [resolvable:$true] %s187
          %190 = dma.vmem_to_smem %s188, 16, [#allocation8], [#allocation9]
        $region20: #{tpu_custom_call.1} parent=11 // pred_fallthru
          _
        // Predicated region
        $region21: #{tpu_custom_call.1} parent=11 // pred_check
          %p191 = pneg %p109
        $region22: #{tpu_custom_call.1} parent=11 // pred_check_branch
          %193 = sbr.rel (%p191) target = $region24
        $region23: #{tpu_custom_call.1} parent=11 // pred_region
          %195 = vsyncadd [#allocation9], 0
          %s197 = sshll.u32 %s3, 4
          %s198 = int_to_ptr.vmem [resolvable:$true] %s197
          %200 = dma.vmem_to_smem %s198, 16, [#allocation10], [#allocation9]
        $region24: #{tpu_custom_call.1} parent=11 // pred_fallthru
          _
        // Predicated region
        $region25: #{tpu_custom_call.1} parent=11 // pred_check
          %p201 = pneg %p130
        $region26: #{tpu_custom_call.1} parent=11 // pred_check_branch
          %203 = sbr.rel (%p201) target = $region28
        $region27: #{tpu_custom_call.1} parent=11 // pred_region
          _
        $region28: #{tpu_custom_call.1} parent=11 // pred_fallthru
          _
      $region12: #{tpu_custom_call.1} parent=5 // pred_fallthru
        _
      %p204 = scmp.lt.s32.totalorder %s20, 2
      // Predicated region
      $region29: #{tpu_custom_call.1} parent=5 // pred_check
        %p205 = pneg %p204
      $region30: #{tpu_custom_call.1} parent=5 // pred_check_branch
        %207 = sbr.rel (%p205) target = $region32
      $region31: #{tpu_custom_call.1} parent=5 // pred_region
        // Predicated region
        $region33: #{tpu_custom_call.1} parent=31 // pred_check
          %p208 = pneg %p40
        $region34: #{tpu_custom_call.1} parent=31 // pred_check_branch
          %210 = sbr.rel (%p208) target = $region36
        $region35: #{tpu_custom_call.1} parent=31 // pred_region
          %s211 = sand.u32 %s30, 1
          %s212 = scalar_lea.sflag [#allocation4], %s211
          %s213 = sand.u32 %s30, 1
          %s214 = smul.addr %s213, 8
          %s215 = scalar_lea.vmem [#allocation3], %s214
          %217 = vsyncadd %s212, 0
          %s218 = smul.addr %s20, 8
          %s219 = scalar_lea.hbm %s0, %s218
          %s221 = sshll.u32 %s219, 4
          %s222 = int_to_ptr.hbm [resolvable:$true] %s221
          %s223 = sshll.u32 %s215, 4
          %s224 = int_to_ptr.vmem [resolvable:$true] %s223
          %226 = dma.hbm_to_vmem [thread:$0]  %s222, 128, %s224, %s212
        $region36: #{tpu_custom_call.1} parent=31 // pred_fallthru
          _
      $region32: #{tpu_custom_call.1} parent=5 // pred_fallthru
        _
      %p227 = scmp.le.s32.totalorder 1, %s20
      %p228 = scmp.lt.s32.totalorder %s20, 3
      %p229 = pnand %p227, %p228
      %p230 = pneg %p229
      // Predicated region
      $region37: #{tpu_custom_call.1} parent=5 // pred_check
        _
      $region38: #{tpu_custom_call.1} parent=5 // pred_check_branch
        %232 = sbr.rel (%p229) target = $region40
      $region39: #{tpu_custom_call.1} parent=5 // pred_region
        %s233 = ssub.s32 %s20, 1
        %s234 = sand.u32 %s33, 1
        %s235 = scalar_lea.sflag [#allocation4], %s234
        %s236 = sand.u32 %s33, 1
        %s237 = smul.addr %s236, 8
        %s238 = scalar_lea.vmem [#allocation3], %s237
        // Predicated region
        $region41: #{tpu_custom_call.1} parent=39 // pred_check
          %p239 = pneg %p46
        $region42: #{tpu_custom_call.1} parent=39 // pred_check_branch
          %241 = sbr.rel (%p239) target = $region44
        $region43: #{tpu_custom_call.1} parent=39 // pred_region
          %243 = dma.done %s235, 128
        $region44: #{tpu_custom_call.1} parent=39 // pred_fallthru
          _
        // Predicated region
        $region45: #{tpu_custom_call.1} parent=39 // pred_check
          %p244 = pneg %p67
        $region46: #{tpu_custom_call.1} parent=39 // pred_check_branch
          %246 = sbr.rel (%p244) target = $region48
        $region47: #{tpu_custom_call.1} parent=39 // pred_region
          %248 = dma.done [#allocation6], 16
        $region48: #{tpu_custom_call.1} parent=39 // pred_fallthru
          _
        // Predicated region
        $region49: #{tpu_custom_call.1} parent=39 // pred_check
          %p249 = pneg %p88
        $region50: #{tpu_custom_call.1} parent=39 // pred_check_branch
          %251 = sbr.rel (%p249) target = $region52
        $region51: #{tpu_custom_call.1} parent=39 // pred_region
          %253 = dma.done [#allocation9], 16
        $region52: #{tpu_custom_call.1} parent=39 // pred_fallthru
          _
        // Predicated region
        $region53: #{tpu_custom_call.1} parent=39 // pred_check
          %p254 = pneg %p109
        $region54: #{tpu_custom_call.1} parent=39 // pred_check_branch
          %256 = sbr.rel (%p254) target = $region56
        $region55: #{tpu_custom_call.1} parent=39 // pred_region
          %258 = dma.done [#allocation9], 16
        $region56: #{tpu_custom_call.1} parent=39 // pred_fallthru
          _
        %259 = sfence
        %s260 = sand.u32 %s33, 1
        %s261 = scalar_lea.sflag [#allocation4], %s260
        %s262 = sand.u32 %s33, 1
        %s263 = smul.addr %s262, 8
        %s264 = scalar_lea.vmem [#allocation3], %s263
        %p265 = pneg %p46
        %p266 = pneg %p43
        %p267 = pneg %p67
        %p268 = pneg %p64
        %p269 = pneg %p88
        %p270 = pneg %p85
        %p271 = pneg %p109
        %p272 = pneg %p106
        %p273 = pneg %p130
        %p274 = pneg %p127
        %p275 = pneg %p156
        %p276 = pneg %p153
        %s277 = sand.u32 %s143, 1
        %s278 = scalar_lea.sflag [#allocation5], %s277
        %s279 = sand.u32 %s143, 1
        %s280 = smul.addr %s279, 8
        %s281 = scalar_lea.vmem [#allocation11], %s280
        %v282 = vld [vmem:[%s238] sm:$0xff]
        %s283 = sld [smem:[#allocation2]]
        %v284 = vstv %s283
        %s285 = sld [smem:[#allocation7]]
        %v286 = vstv %s285
        %v287 = vmul.f32 %v282, %v286
        %s288 = sld [smem:[#allocation8]]
        %v289 = vstv %s288
        %v290 = vadd.f32 %v287, %v289
        %v291 = vtanh.pop %v290
        %s292 = sld [smem:[#allocation10]]
        %v293 = vstv %s292
        %v294 = vmul.f32 %v291, %v293
        %v295 = vadd.f32 %v284, %v294
        %s296 = sld [smem:[#allocation7 + $0x1]]
        %v297 = vstv %s296
        %v298 = vmul.f32 %v282, %v297
        %s299 = sld [smem:[#allocation8 + $0x1]]
        %v300 = vstv %s299
        %v301 = vadd.f32 %v298, %v300
        %v302 = vtanh.pop %v301
        %s303 = sld [smem:[#allocation10 + $0x1]]
        %v304 = vstv %s303
        %v305 = vmul.f32 %v302, %v304
        %v306 = vadd.f32 %v295, %v305
        %s307 = sld [smem:[#allocation7 + $0x2]]
        %v308 = vstv %s307
        %v309 = vmul.f32 %v282, %v308
        %s310 = sld [smem:[#allocation8 + $0x2]]
        %v311 = vstv %s310
        %v312 = vadd.f32 %v309, %v311
        %v313 = vtanh.pop %v312
        %s314 = sld [smem:[#allocation10 + $0x2]]
        %v315 = vstv %s314
        %v316 = vmul.f32 %v313, %v315
        %v317 = vadd.f32 %v306, %v316
        %s318 = sld [smem:[#allocation7 + $0x3]]
        %v319 = vstv %s318
        %v320 = vmul.f32 %v282, %v319
        %s321 = sld [smem:[#allocation8 + $0x3]]
        %v322 = vstv %s321
        %v323 = vadd.f32 %v320, %v322
        %v324 = vtanh.pop %v323
        %s325 = sld [smem:[#allocation10 + $0x3]]
        %v326 = vstv %s325
        %v327 = vmul.f32 %v324, %v326
        %v328 = vadd.f32 %v317, %v327
        %s329 = sld [smem:[#allocation7 + $0x4]]
        %v330 = vstv %s329
        %v331 = vmul.f32 %v282, %v330
        %s332 = sld [smem:[#allocation8 + $0x4]]
        %v333 = vstv %s332
        %v334 = vadd.f32 %v331, %v333
        %v335 = vtanh.pop %v334
        %s336 = sld [smem:[#allocation10 + $0x4]]
        %v337 = vstv %s336
        %v338 = vmul.f32 %v335, %v337
        %v339 = vadd.f32 %v328, %v338
        %s340 = sld [smem:[#allocation7 + $0x5]]
        %v341 = vstv %s340
        %v342 = vmul.f32 %v282, %v341
        %s343 = sld [smem:[#allocation8 + $0x5]]
        %v344 = vstv %s343
        %v345 = vadd.f32 %v342, %v344
        %v346 = vtanh.pop %v345
        %s347 = sld [smem:[#allocation10 + $0x5]]
        %v348 = vstv %s347
        %v349 = vmul.f32 %v346, %v348
        %v350 = vadd.f32 %v339, %v349
        %s351 = sld [smem:[#allocation7 + $0x6]]
        %v352 = vstv %s351
        %v353 = vmul.f32 %v282, %v352
        %s354 = sld [smem:[#allocation8 + $0x6]]
        %v355 = vstv %s354
        %v356 = vadd.f32 %v353, %v355
        %v357 = vtanh.pop %v356
        %s358 = sld [smem:[#allocation10 + $0x6]]
        %v359 = vstv %s358
        %v360 = vmul.f32 %v357, %v359
        %v361 = vadd.f32 %v350, %v360
        %s362 = sld [smem:[#allocation7 + $0x7]]
        %v363 = vstv %s362
        %v364 = vmul.f32 %v282, %v363
        %s365 = sld [smem:[#allocation8 + $0x7]]
        %v366 = vstv %s365
        %v367 = vadd.f32 %v364, %v366
        %v368 = vtanh.pop %v367
        %s369 = sld [smem:[#allocation10 + $0x7]]
        %v370 = vstv %s369
        %v371 = vmul.f32 %v368, %v370
        %v372 = vadd.f32 %v361, %v371
        %s373 = sld [smem:[#allocation7 + $0x8]]
        %v374 = vstv %s373
        %v375 = vmul.f32 %v282, %v374
        %s376 = sld [smem:[#allocation8 + $0x8]]
        %v377 = vstv %s376
        %v378 = vadd.f32 %v375, %v377
        %v379 = vtanh.pop %v378
        %s380 = sld [smem:[#allocation10 + $0x8]]
        %v381 = vstv %s380
        %v382 = vmul.f32 %v379, %v381
        %v383 = vadd.f32 %v372, %v382
        %s384 = sld [smem:[#allocation7 + $0x9]]
        %v385 = vstv %s384
        %v386 = vmul.f32 %v282, %v385
        %s387 = sld [smem:[#allocation8 + $0x9]]
        %v388 = vstv %s387
        %v389 = vadd.f32 %v386, %v388
        %v390 = vtanh.pop %v389
        %s391 = sld [smem:[#allocation10 + $0x9]]
        %v392 = vstv %s391
        %v393 = vmul.f32 %v390, %v392
        %v394 = vadd.f32 %v383, %v393
        %s395 = sld [smem:[#allocation7 + $0xa]]
        %v396 = vstv %s395
        %v397 = vmul.f32 %v282, %v396
        %s398 = sld [smem:[#allocation8 + $0xa]]
        %v399 = vstv %s398
        %v400 = vadd.f32 %v397, %v399
        %v401 = vtanh.pop %v400
        %s402 = sld [smem:[#allocation10 + $0xa]]
        %v403 = vstv %s402
        %v404 = vmul.f32 %v401, %v403
        %v405 = vadd.f32 %v394, %v404
        %s406 = sld [smem:[#allocation7 + $0xb]]
        %v407 = vstv %s406
        %v408 = vmul.f32 %v282, %v407
        %s409 = sld [smem:[#allocation8 + $0xb]]
        %v410 = vstv %s409
        %v411 = vadd.f32 %v408, %v410
        %v412 = vtanh.pop %v411
        %s413 = sld [smem:[#allocation10 + $0xb]]
        %v414 = vstv %s413
        %v415 = vmul.f32 %v412, %v414
        %v416 = vadd.f32 %v405, %v415
        %s417 = sld [smem:[#allocation7 + $0xc]]
        %v418 = vstv %s417
        %v419 = vmul.f32 %v282, %v418
        %s420 = sld [smem:[#allocation8 + $0xc]]
        %v421 = vstv %s420
        %v422 = vadd.f32 %v419, %v421
        %v423 = vtanh.pop %v422
        %s424 = sld [smem:[#allocation10 + $0xc]]
        %v425 = vstv %s424
        %v426 = vmul.f32 %v423, %v425
        %v427 = vadd.f32 %v416, %v426
        %428 = vst [vmem:[%s281] sm:$0xff] %v427
        %s429 = sand.u32 %s143, 1
        %s430 = scalar_lea.sflag [#allocation5], %s429
        %s431 = sand.u32 %s143, 1
        %s432 = smul.addr %s431, 8
        %s433 = scalar_lea.vmem [#allocation11], %s432
        // Predicated region
        $region57: #{tpu_custom_call.1} parent=39 // pred_check
          %p434 = pneg %p153
        $region58: #{tpu_custom_call.1} parent=39 // pred_check_branch
          %436 = sbr.rel (%p434) target = $region60
        $region59: #{tpu_custom_call.1} parent=39 // pred_region
          %438 = vsyncadd %s430, 0
          %s439 = smul.addr %s25, 8
          %s440 = scalar_lea.hbm %s5, %s439
          %s442 = sshll.u32 %s433, 4
          %s443 = int_to_ptr.vmem [resolvable:$true] %s442
          %s444 = sshll.u32 %s440, 4
          %s445 = int_to_ptr.hbm [resolvable:$true] %s444
          %447 = dma.vmem_to_hbm [thread:$0]  %s443, 128, %s445, %s430
        $region60: #{tpu_custom_call.1} parent=39 // pred_fallthru
          _
      $region40: #{tpu_custom_call.1} parent=5 // pred_fallthru
        _
      %p448 = scmp.le.s32.totalorder 2, %s20
      // Predicated region
      $region61: #{tpu_custom_call.1} parent=5 // pred_check
        %p449 = pneg %p448
      $region62: #{tpu_custom_call.1} parent=5 // pred_check_branch
        %451 = sbr.rel (%p449) target = $region64
      $region63: #{tpu_custom_call.1} parent=5 // pred_region
        %s452 = ssub.s32 %s20, 2
        // Predicated region
        $region65: #{tpu_custom_call.1} parent=63 // pred_check
          %p453 = pneg %p159
        $region66: #{tpu_custom_call.1} parent=63 // pred_check_branch
          %455 = sbr.rel (%p453) target = $region68
        $region67: #{tpu_custom_call.1} parent=63 // pred_region
          %s456 = sand.u32 %s144, 1
          %s457 = scalar_lea.sflag [#allocation5], %s456
          %s458 = sand.u32 %s144, 1
          %s459 = smul.addr %s458, 8
          %s460 = scalar_lea.vmem [#allocation11], %s459
          %462 = dma.done %s457, 128
        $region68: #{tpu_custom_call.1} parent=63 // pred_fallthru
          _
      $region64: #{tpu_custom_call.1} parent=5 // pred_fallthru
        _
    $region6: #{tpu_custom_call.1} parent=1 // loop_footer
      %s24 = sadd.s32 1, %s20
    $region7: #{tpu_custom_call.1} parent=1 // loop_footer_branch
      %19 = sbr.rel target = $region3
    $region8: #{tpu_custom_call.1} parent=1 // loop_exit
      _
    %463 = vsyncpa [#allocation4], 1
    %s464 = scalar_lea.sflag [#allocation4], 1
    %465 = vsyncpa %s464, 1
    %466 = vsyncpa [#allocation5], 1
    %s467 = scalar_lea.sflag [#allocation5], 1
    %468 = vsyncpa %s467, 1
    %469 = vsyncpa [#allocation6], 1
    %s470 = scalar_lea.sflag [#allocation6], 1
    %471 = vsyncpa %s470, 1
    %472 = vsyncpa [#allocation9], 1

</llo_original>
